<compile_context>
chip_gen: v6e
topology: v6e:2x2x1
jax: 0.10.0
libtpu: 0.0.40
codegen_flags: <defaults>
</compile_context>

<pallas_src>
import functools

import jax
import jax.numpy as jnp
import numpy as np
from jax.experimental import pallas as pl
from jax.experimental.pallas import tpu as pltpu


# ---------------------------------------------------------------------------
# One-time probe of pltpu.roll's shift convention so the conv taps stay correct
# regardless of the installed jax version's rotate direction.
# ---------------------------------------------------------------------------
_ROLL_LIKE_JNP = None


def _roll_like_jnp() -> bool:
    global _ROLL_LIKE_JNP
    if _ROLL_LIKE_JNP is None:
        def k(x_ref, o_ref):
            o_ref[...] = pltpu.roll(x_ref[...], 1, axis=1)

        x = jnp.broadcast_to(jnp.arange(128, dtype=jnp.float32), (8, 128))
        y = pl.pallas_call(
            k, out_shape=jax.ShapeDtypeStruct((8, 128), jnp.float32))(x)
        # jnp.roll convention: roll([0..127], 1)[0] == 127
        _ROLL_LIKE_JNP = bool(float(y[0, 0]) == 127.0)
    return _ROLL_LIKE_JNP


# ---------------------------------------------------------------------------
# In-kernel LayerEpilogue math (operates on a (C, HW) value held in VMEM/vregs)
# ---------------------------------------------------------------------------
def _epilogue(x, noise_row, noise_w_col, style_col):
    """ApplyNoise + LeakyReLU(0.2) + InstanceNorm(eps=1e-8) + AdaIN style."""
    C, HW = x.shape
    # ApplyNoise: x + weight[:,None] * noise
    x = x + noise_w_col * noise_row                      # (C,1)*(1,HW) -> (C,HW)
    # LeakyReLU(0.2)
    x = jnp.where(x >= 0, x, 0.2 * x)
    # InstanceNorm over spatial, single pass (mean and E[x^2])
    inv_n = 1.0 / HW
    mean = jnp.sum(x, axis=1, keepdims=True) * inv_n     # (C,1)
    ex2 = jnp.sum(x * x, axis=1, keepdims=True) * inv_n  # (C,1)
    var = ex2 - mean * mean
    x = (x - mean) * jax.lax.rsqrt(var + 1e-8)
    # AdaIN: style precomputed in the wrapper as leaky_relu(FC(latent))
    sa = style_col[:C]                                   # (C,1)
    sb = style_col[C:]                                   # (C,1)
    return x * (sa + 1.0) + sb


# ---------------------------------------------------------------------------
# Fused GBlock kernel: upsample -> adaIn1 -> conv3x3 -> adaIn2 (one batch/step)
# ---------------------------------------------------------------------------
def gblock_kernel(x_ref, up_ref, row_ref, col_ref, n1_ref, n2_ref,
                  nw1_ref, nw2_ref, s1_ref, s2_ref, w_ref, b_ref, o_ref,
                  *, H, W, roll_like_jnp):
    C = x_ref.shape[1]
    HW = H * W

    # Upscale2d(factor=2, gain=1): nearest-neighbour upsample as (C,hw)@(hw,HW)
    x = jnp.dot(x_ref[0], up_ref[...], preferred_element_type=jnp.float32)

    # adaIn1
    x = _epilogue(x, n1_ref[0], nw1_ref[...], s1_ref[0])

    # conv1: 3x3, padding=1, as 9 accumulating (C,C)@(C,HW) taps.
    # Spatial shifts = lane rotations + boundary masks (no im2col, no HBM).
    row = row_ref[...]                                   # (1, HW) int32: i index
    col = col_ref[...]                                   # (1, HW) int32: j index
    acc = jnp.zeros((C, HW), jnp.float32)
    for di in (-1, 0, 1):
        for dj in (-1, 0, 1):
            off = di * W + dj
            if off == 0:
                shifted = x
            else:
                shift = (-off) % HW if roll_like_jnp else off % HW
                shifted = pltpu.roll(x, shift, axis=1)   # value at l <- x[l+off]
            conds = []
            if di < 0:
                conds.append(row >= -di)
            if di > 0:
                conds.append(row < H - di)
            if dj < 0:
                conds.append(col >= -dj)
            if dj > 0:
                conds.append(col < W - dj)
            if conds:
                m = conds[0]
                for c in conds[1:]:
                    m = m & c
                tap = jnp.where(m, shifted, 0.0)
            else:
                tap = shifted
            wt = w_ref[(di + 1) * 3 + (dj + 1)]          # (C_out, C_in)
            acc = acc + jnp.dot(wt, tap, preferred_element_type=jnp.float32)
    y = acc + b_ref[...]

    # adaIn2
    o_ref[0] = _epilogue(y, n2_ref[0], nw2_ref[...], s2_ref[0])


# ---------------------------------------------------------------------------
# Wrapper: layout plumbing + tiny style FC, then one fused pallas_call
# ---------------------------------------------------------------------------
def gblock_forward(x, dlatent, noise_inputs, params, res=3):
    B, C, h, w = x.shape
    H, W = 2 * h, 2 * w
    hw, HW = h * w, H * W
    idx1, idx2 = res * 2 - 4, res * 2 - 3

    # Constant upsample matrix and spatial index maps (tiny, built once).
    q = jnp.arange(HW, dtype=jnp.int32)
    row = (q // W).reshape(1, HW)
    col = (q % W).reshape(1, HW)
    src = (q // W // 2) * w + (q % W) // 2
    up_mat = (jnp.arange(hw, dtype=jnp.int32)[:, None]
              == src[None, :]).astype(jnp.float32)                 # (hw, HW)

    # Style FC (ApplyStyle's EqualizedFC + leaky_relu) hoisted out of the grid.
    def style(lat, p):
        y = lat @ p["fc_w_eff"].T + p["fc_b_eff"]
        return jnp.where(y >= 0, y, 0.2 * y)

    s1 = style(dlatent[:, idx1], params["adaIn1"])[:, :, None]     # (B, 2C, 1)
    s2 = style(dlatent[:, idx2], params["adaIn2"])[:, :, None]

    x_flat = x.reshape(B, C, hw)
    n1 = noise_inputs[idx1].reshape(B, 1, HW)
    n2 = noise_inputs[idx2].reshape(B, 1, HW)
    w_taps = params["conv_w_eff"].transpose(2, 3, 0, 1).reshape(9, C, C)
    nw1 = params["adaIn1"]["noise_w"][:, None]
    nw2 = params["adaIn2"]["noise_w"][:, None]
    cb = params["conv_b_eff"][:, None]

    kernel = functools.partial(gblock_kernel, H=H, W=W,
                               roll_like_jnp=_roll_like_jnp())

    out = pl.pallas_call(
        kernel,
        out_shape=jax.ShapeDtypeStruct((B, C, HW), jnp.float32),
        grid=(B,),
        in_specs=[
            pl.BlockSpec((1, C, hw), lambda b: (b, 0, 0)),       # x (pre-upsample)
            pl.BlockSpec((hw, HW), lambda b: (0, 0)),            # upsample matrix
            pl.BlockSpec((1, HW), lambda b: (0, 0)),             # row index map
            pl.BlockSpec((1, HW), lambda b: (0, 0)),             # col index map
            pl.BlockSpec((1, 1, HW), lambda b: (b, 0, 0)),       # noise 1
            pl.BlockSpec((1, 1, HW), lambda b: (b, 0, 0)),       # noise 2
            pl.BlockSpec((C, 1), lambda b: (0, 0)),              # noise weight 1
            pl.BlockSpec((C, 1), lambda b: (0, 0)),              # noise weight 2
            pl.BlockSpec((1, 2 * C, 1), lambda b: (b, 0, 0)),    # style 1
            pl.BlockSpec((1, 2 * C, 1), lambda b: (b, 0, 0)),    # style 2
            pl.BlockSpec((9, C, C), lambda b: (0, 0, 0)),        # conv taps
            pl.BlockSpec((C, 1), lambda b: (0, 0)),              # conv bias
        ],
        out_specs=pl.BlockSpec((1, C, HW), lambda b: (b, 0, 0)),
        compiler_params=pltpu.CompilerParams(
            dimension_semantics=("parallel",)),
    )(x_flat, up_mat, row, col, n1, n2, nw1, nw2, s1, s2, w_taps, cb)
    return out.reshape(B, C, H, W)


# ---------------------------------------------------------------------------
# Deterministic parameter init (matches PyTorch __init__ shapes / wscale)
# ---------------------------------------------------------------------------
def init_params(key, C, D):
    k_conv, k_fc1, k_fc2 = jax.random.split(key, 3)

    # EqualizedConv2d(C, C, 3, use_wscale=True, gain=sqrt(2), lrmul=1)
    fan_in_conv = C * C * 9
    he_std_conv = (2.0 ** 0.5) * fan_in_conv ** (-0.5)
    conv_w = jax.random.normal(k_conv, (C, C, 3, 3), jnp.float32)  # init_std=1
    conv_w_eff = conv_w * he_std_conv                              # weight*w_coef
    conv_b_eff = jnp.zeros((C,), jnp.float32)

    # EqualizedFC(D, 2C, gain=1.0, use_wscale=True) for ApplyStyle
    def make_fc(k):
        fan_in = D * 2 * C
        he_std = 1.0 * fan_in ** (-0.5)
        w = jax.random.normal(k, (2 * C, D), jnp.float32)          # init_std=1
        return w * he_std, jnp.zeros((2 * C,), jnp.float32)

    fc1_w, fc1_b = make_fc(k_fc1)
    fc2_w, fc2_b = make_fc(k_fc2)

    return {
        "conv_w_eff": conv_w_eff,
        "conv_b_eff": conv_b_eff,
        "adaIn1": {"noise_w": jnp.zeros((C,), jnp.float32),
                   "fc_w_eff": fc1_w, "fc_b_eff": fc1_b},
        "adaIn2": {"noise_w": jnp.zeros((C,), jnp.float32),
                   "fc_w_eff": fc2_w, "fc_b_eff": fc2_b},
    }


# ---------------------------------------------------------------------------
# Pure-JAX reference (for correctness check only)
# ---------------------------------------------------------------------------
def ref_epilogue(x, noise, lat, noise_w, fc_w, fc_b):
    B, C = x.shape[0], x.shape[1]
    x = x + noise_w.reshape(1, C, 1, 1) * noise
    x = jnp.where(x >= 0, x, 0.2 * x)
    mean = jnp.mean(x, axis=(2, 3), keepdims=True)
    xc = x - mean
    var = jnp.mean(xc * xc, axis=(2, 3), keepdims=True)
    x = xc * jax.lax.rsqrt(var + 1e-8)
    y = lat @ fc_w.T + fc_b
    y = jnp.where(y >= 0, y, 0.2 * y)
    sa = y[:, :C].reshape(B, C, 1, 1)
    sb = y[:, C:].reshape(B, C, 1, 1)
    return x * (sa + 1.0) + sb


def ref_forward(x, dlatent, noise_inputs, params, res=3):
    x = jnp.repeat(jnp.repeat(x, 2, axis=2), 2, axis=3)
    idx1, idx2 = res * 2 - 4, res * 2 - 3
    p1, p2 = params["adaIn1"], params["adaIn2"]
    x = ref_epilogue(x, noise_inputs[idx1], dlatent[:, idx1],
                     p1["noise_w"], p1["fc_w_eff"], p1["fc_b_eff"])
    x = jax.lax.conv_general_dilated(
        x, params["conv_w_eff"], (1, 1), "SAME",
        dimension_numbers=("NCHW", "OIHW", "NCHW"))
    x = x + params["conv_b_eff"].reshape(1, -1, 1, 1)
    x = ref_epilogue(x, noise_inputs[idx2], dlatent[:, idx2],
                     p2["noise_w"], p2["fc_w_eff"], p2["fc_b_eff"])
    return x


if __name__ == "__main__":
    key = jax.random.PRNGKey(0)
    kx, kd, kn, kp = jax.random.split(key, 4)

    res = 3
    B, C, D = 2, 16, 32          # nf(res-2)=16 (small), dlatent_size=32
    h_in = w_in = 8              # input spatial; upsampled to 16x16
    H = W = 2 * h_in

    x = jax.random.normal(kx, (B, C, h_in, w_in), jnp.float32)
    dlatent = jax.random.normal(kd, (B, 8, D), jnp.float32)
    nkeys = jax.random.split(kn, 4)
    noise_inputs = [jax.random.normal(k, (B, 1, H, W), jnp.float32) for k in nkeys]

    params = init_params(kp, C, D)

    out = gblock_forward(x, dlatent, noise_inputs, params, res=res)
    out = jax.block_until_ready(out)

    ref = ref_forward(x, dlatent, noise_inputs, params, res=res)
    np.testing.assert_allclose(np.asarray(out), np.asarray(ref),
                               rtol=1e-3, atol=1e-3)
    assert out.shape == (B, C, H, W)
    print("KERNEL_OK")
</pallas_src>

<mosaic_0001>
module attributes {stable_mosaic.version = 11 : i64} {
  func.func @k(%arg0: memref<8x128xf32, #tpu.memory_space<vmem>>, %arg1: memref<8x128xf32, #tpu.memory_space<vmem>>) attributes {dimension_semantics = [], scalar_prefetch = 0 : i64, scratch_operands = 0 : i64, tpu.core_type = #tpu.core_type<tc>} {
    %c0 = arith.constant 0 : index
    %c0_0 = arith.constant 0 : index
    %0 = vector.load %arg0[%c0, %c0_0] : memref<8x128xf32, #tpu.memory_space<vmem>>, vector<8x128xf32>
    %c1_i32 = arith.constant 1 : i32
    %1 = tpu.dynamic_rotate %0 by %c1_i32 dim 1 : vector<8x128xf32>, i32 -> vector<8x128xf32>
    %c0_1 = arith.constant 0 : index
    %c0_2 = arith.constant 0 : index
    %2 = vector.load %arg1[%c0_1, %c0_2] : memref<8x128xf32, #tpu.memory_space<vmem>>, vector<8x128xf32>
    tpu.vector_store %arg1[%c0_1, %c0_2], %1 {strides = array<i32>} : memref<8x128xf32, #tpu.memory_space<vmem>>, vector<8x128xf32>,
    return
  }
}

</mosaic_0001>

<llo_original>
// kernel: tpu_custom_call.1
$region0: #{tpu_custom_call.1}
  #allocation0 [shape = 'u32[]', space=smem, size = 0x4, offset = 0x4, fixed_abs, tag = 'smem constant byte address 0x4 - core index']
  #allocation1 [shape = 'u32[144,128]{1,0:T(1,128)}', space=vmem, size = 0x12000, scoped, tag = 'internal scratch']
  %s0 = inlined_call_operand.hbm [shape: f32[8,128], index: 0, kind: input, shape index: {}]
  %s1 = inlined_call_operand.hbm [shape: f32[8,128], index: 1, kind: output, shape index: {}]
  %s2 = sld [smem:[#allocation0]]
  $region18: #{tpu_custom_call.1} parent=0
    _
  %s4 = ssub.s32 1, %s2
  %s5 = scalar_select 0, %s4, %s2
  $region1: #{tpu_custom_call.1} parent=0
    #allocation2 [shape = 'u8[4096]{0}', space=vmem, size = 0x1000, scoped, tag = 'input window, operand 0, single buffered']
    #allocation3 [shape = 's32[1]{0}', space=sflag, size = 0x4, scoped, tag = 'scoped memory for tpu_custom_call.1']
    #allocation4 [shape = 's32[1]{0}', space=sflag, size = 0x4, scoped, tag = 'scoped memory for tpu_custom_call.1']
    #allocation5 [shape = 'u8[4096]{0}', space=vmem, size = 0x1000, scoped, tag = 'output window, operand 0, single buffered']
    %6 = vsyncpa [#allocation3], 0
    %7 = vsyncpa [#allocation4], 0
    // Predicated region
    $region2: #{tpu_custom_call.1} parent=1 // pred_check
      _
    $region3: #{tpu_custom_call.1} parent=1 // pred_check_branch
      %9 = sbr.rel (0) target = $region5
    $region4: #{tpu_custom_call.1} parent=1 // pred_region
      %s11 = ssub.s32 128, 128
      %12 = vsyncadd [#allocation3], %s11
      %s14 = sshll.u32 [#allocation2], 4
      %s15 = int_to_ptr.vmem [resolvable:$true] %s14
      %17 = dma.hbm_to_vmem [thread:$0]  %s0, 128, %s15, [#allocation3]
    $region5: #{tpu_custom_call.1} parent=1 // pred_fallthru
      _
    // Predicated region
    $region6: #{tpu_custom_call.1} parent=1 // pred_check
      _
    $region7: #{tpu_custom_call.1} parent=1 // pred_check_branch
      %19 = sbr.rel (0) target = $region9
    $region8: #{tpu_custom_call.1} parent=1 // pred_region
      %20 = dma.done [#allocation3], 128
    $region9: #{tpu_custom_call.1} parent=1 // pred_fallthru
      _
    %v21 = vld [vmem:[#allocation2] sm:$0xff]
    %22 = vrot.lane.b32.xlu0 %v21, 1
    %v23 = vpop.permute.xlu0 %22
    %24 = vst [vmem:[#allocation5] sm:$0xff] %v23
    // Predicated region
    $region10: #{tpu_custom_call.1} parent=1 // pred_check
      _
    $region11: #{tpu_custom_call.1} parent=1 // pred_check_branch
      %26 = sbr.rel (0) target = $region13
    $region12: #{tpu_custom_call.1} parent=1 // pred_region
      %s28 = ssub.s32 128, 128
      %29 = vsyncadd [#allocation4], %s28
      %s31 = sshll.u32 [#allocation5], 4
      %s32 = int_to_ptr.vmem [resolvable:$true] %s31
      %34 = dma.vmem_to_hbm [thread:$0]  %s32, 128, %s1, [#allocation4]
    $region13: #{tpu_custom_call.1} parent=1 // pred_fallthru
      _
    // Predicated region
    $region14: #{tpu_custom_call.1} parent=1 // pred_check
      _
    $region15: #{tpu_custom_call.1} parent=1 // pred_check_branch
      %36 = sbr.rel (0) target = $region17
    $region16: #{tpu_custom_call.1} parent=1 // pred_region
      %37 = dma.done [#allocation4], 128
    $region17: #{tpu_custom_call.1} parent=1 // pred_fallthru
      _
    %38 = vsyncpa [#allocation3], 1
    %39 = vsyncpa [#allocation4], 1

</llo_original>
